<compile_context>
chip_gen: v5e
topology: v5e:2x2
jax: 0.10.0
libtpu: 0.0.40
codegen_flags: <defaults>
</compile_context>

<pallas_src>
import jax
import jax.numpy as jnp
from jax.experimental import pallas as pl
from jax.experimental.pallas import tpu as pltpu

BN_EPS = 1e-5
_SUBLANE = 8                                # f32 sublane granularity
_MAX_BATCH_TILE = 256                       # rows per grid step fed to MXU
_K_TILE = 2048                              # K tile when W can't stay resident
_RESIDENT_VMEM_BUDGET = 20 * 1024 * 1024    # whole-K resident below this
_BUFFERED1_MIN_BYTES = 4 * 1024 * 1024      # hint 1-buffering only when big


def _round_up(x, m):
    return (x + m - 1) // m * m


def mrna_kernel(x_ref, w_ref, b_ref, o_ref):
    """One (bm, M) output tile.  K reduction runs over grid axis 1 and
    accumulates into the resident f32 output block; bias is added on the
    first K step and ReLU is applied on the last."""
    k = pl.program_id(1)
    part = jnp.dot(x_ref[...], w_ref[...], preferred_element_type=jnp.float32)

    @pl.when(k == 0)
    def _():
        o_ref[...] = part + b_ref[...]

    @pl.when(k > 0)
    def _():
        o_ref[...] = o_ref[...] + part

    @pl.when(k == pl.num_programs(1) - 1)
    def _():
        o_ref[...] = jnp.maximum(o_ref[...], 0.0)


def prepare_params(w_pt, b_pt, gamma, beta, run_mean, run_var, *,
                   use_bf16=False):
    """One-off fold of eval-mode BatchNorm1d into the Linear weight/bias.

    Call ONCE per set of weights (not per forward): a per-call fold would
    read/scale/transpose/re-write W in HBM on every step (~3x the HBM traffic
    the matmul itself needs for large mrna_length).

        s  = gamma / sqrt(running_var + eps)
        W' = (W * s[:, None]).T            # (D_in, M), lane-dense in M
        b' = (bias - running_mean) * s + beta
    """
    s = gamma.astype(jnp.float32) * jax.lax.rsqrt(
        run_var.astype(jnp.float32) + BN_EPS)
    w_f = (w_pt.astype(jnp.float32) * s[:, None]).T            # (D_in, M)
    b_f = ((b_pt.astype(jnp.float32) - run_mean) * s + beta).reshape(1, -1)
    if use_bf16:
        w_f = w_f.astype(jnp.bfloat16)   # MXU operand; accumulation stays f32
    return w_f, b_f.astype(jnp.float32)


@jax.jit
def mrna_net_forward(x, w_f, b_f):
    """relu(x @ W' + b').  x: (B, D_in) f32.  w_f: (D_in, M) f32 or bf16.
    b_f: (1, M) f32.  (w_f, b_f produced by prepare_params.)"""
    B, D_in = x.shape
    k_w, M = w_f.shape
    assert k_w == D_in, "weight / input feature mismatch"

    # bf16 MXU operands (f32 accumulation) when the prepared weight is bf16.
    if w_f.dtype == jnp.bfloat16:
        x = x.astype(jnp.bfloat16)
    x_item = x.dtype.itemsize
    w_item = w_f.dtype.itemsize

    # ---- batch tiling: fixed tile, pad the tail, "parallel" grid axis ----
    bm = min(_MAX_BATCH_TILE, _round_up(B, _SUBLANE))
    b_pad = _round_up(B, bm)
    if b_pad != B:
        x = jnp.pad(x, ((0, b_pad - B), (0, 0)))
    grid_b = b_pad // bm

    # ---- K tiling only when the resident footprint would blow VMEM ----
    resident_bytes = (2 * bm * D_in * x_item      # x double-buffer
                      + D_in * M * w_item         # resident weight
                      + 2 * M * 4                 # bias
                      + 2 * bm * M * 4)           # output double-buffer
    if resident_bytes <= _RESIDENT_VMEM_BUDGET:
        tk = D_in
        k_pad = D_in
    else:
        tk = _K_TILE
        k_pad = _round_up(D_in, tk)
        if k_pad != D_in:                         # zero-pad K: no-op for dot
            x = jnp.pad(x, ((0, 0), (0, k_pad - D_in)))
            w_f = jnp.pad(w_f, ((0, k_pad - D_in), (0, 0)))
    grid_k = k_pad // tk
    grid = (grid_b, grid_k)

    # Weight BlockSpec: grid-invariant when K is not tiled; a *large* invariant
    # block only needs a single pipeline buffer (halves its VMEM footprint —
    # the binding constraint on v7x's 64 MiB VMEM).
    if grid_k == 1 and D_in * M * w_item >= _BUFFERED1_MIN_BYTES:
        w_spec = pl.BlockSpec((tk, M), lambda i, k: (0, 0),
                              pipeline_mode=pl.Buffered(1))
    else:
        w_spec = pl.BlockSpec((tk, M), lambda i, k: (k, 0))

    compiler_kwargs = dict(dimension_semantics=("parallel", "arbitrary"))
    if grid_k == 1 and resident_bytes > 12 * 1024 * 1024:
        # Large resident weight: raise the scoped-VMEM cap (still well inside
        # v7x's 64 MiB physical VMEM).
        compiler_kwargs["vmem_limit_bytes"] = 28 * 1024 * 1024

    cost = pl.CostEstimate(
        flops=2 * b_pad * k_pad * M,
        transcendentals=0,
        bytes_accessed=(b_pad * k_pad * x_item + k_pad * M * w_item
                        + M * 4 + b_pad * M * 4),
    )

    out = pl.pallas_call(
        mrna_kernel,
        out_shape=jax.ShapeDtypeStruct((b_pad, M), jnp.float32),
        grid=grid,
        in_specs=[
            pl.BlockSpec((bm, tk), lambda i, k: (i, k)),    # x batch/K tile
            w_spec,                                         # folded weight
            pl.BlockSpec((1, M), lambda i, k: (0, 0)),      # folded bias row
        ],
        out_specs=pl.BlockSpec((bm, M), lambda i, k: (i, 0)),
        compiler_params=pltpu.CompilerParams(**compiler_kwargs),
        cost_estimate=cost,
    )(x, w_f, b_f)

    return out[:B] if b_pad != B else out


def reference_forward(x, w_pt, b_pt, gamma, beta, run_mean, run_var):
    """Unfused eval-mode reference (matches the PyTorch module in eval())."""
    z = x @ w_pt.T + b_pt
    zn = (z - run_mean) * jax.lax.rsqrt(run_var + BN_EPS) * gamma + beta
    return jnp.maximum(zn, 0.0)   # Dropout(p=0.4) is identity in eval mode


if __name__ == "__main__":
    B = 8
    MRNA_LEN = 256    # mrna_length (input features)
    M_LEN = 128       # m_length   (output features)

    key = jax.random.PRNGKey(0)
    kx, kw, kb, kg, kbeta, km, kv = jax.random.split(key, 7)

    x = jax.random.normal(kx, (B, MRNA_LEN), dtype=jnp.float32)

    # nn.Linear(mrna_length, m_length): weight (M, D_in), bias (M,)
    w_pt = jax.random.normal(kw, (M_LEN, MRNA_LEN), dtype=jnp.float32) * 0.05
    b_pt = jax.random.normal(kb, (M_LEN,), dtype=jnp.float32) * 0.05

    # BatchNorm1d(m_length) parameters / running stats.
    gamma = 1.0 + 0.1 * jax.random.normal(kg, (M_LEN,), dtype=jnp.float32)
    beta = 0.1 * jax.random.normal(kbeta, (M_LEN,), dtype=jnp.float32)
    run_mean = 0.1 * jax.random.normal(km, (M_LEN,), dtype=jnp.float32)
    run_var = jnp.abs(jax.random.normal(kv, (M_LEN,), dtype=jnp.float32)) + 0.5

    ref = reference_forward(x, w_pt, b_pt, gamma, beta, run_mean, run_var)

    # f32 MXU path (exact up to fold rounding order).
    w_f, b_f = prepare_params(w_pt, b_pt, gamma, beta, run_mean, run_var)
    out = jax.block_until_ready(mrna_net_forward(x, w_f, b_f))
    assert out.shape == (B, M_LEN)
    assert jnp.allclose(out, ref, atol=1e-4, rtol=1e-4), "f32 mismatch"

    # bf16-operand path (f32 accumulation + f32 epilogue) — the production
    # configuration for v5e/v6e/v7x; looser tolerance from bf16 input rounding.
    w_bf, b_bf = prepare_params(w_pt, b_pt, gamma, beta, run_mean, run_var,
                                use_bf16=True)
    out_bf = jax.block_until_ready(mrna_net_forward(x, w_bf, b_bf))
    assert out_bf.shape == (B, M_LEN)
    assert jnp.allclose(out_bf, ref, atol=5e-2, rtol=5e-2), "bf16 mismatch"

    print("KERNEL_OK")
</pallas_src>

<mosaic_0001>
module attributes {stable_mosaic.version = 11 : i64} {
  func.func @mrna_kernel(%arg0: i32, %arg1: i32, %arg2: memref<8x256xf32, #tpu.memory_space<vmem>>, %arg3: memref<256x128xf32, #tpu.memory_space<vmem>>, %arg4: memref<1x128xf32, #tpu.memory_space<vmem>>, %arg5: memref<8x128xf32, #tpu.memory_space<vmem>>) attributes {dimension_semantics = [#tpu.dimension_semantics<parallel>, #tpu.dimension_semantics<arbitrary>], iteration_bounds = array<i64: 1, 1>, scalar_prefetch = 0 : i64, scratch_operands = 0 : i64, tpu.core_type = #tpu.core_type<tc>, window_params = [{transform_indices = @transform_0, window_bounds = array<i64: 8, 256>}, {transform_indices = @transform_1, window_bounds = array<i64: 256, 128>}, {pipeline_mode = #tpu.pipeline_mode<synchronous>, transform_indices = @transform_2, window_bounds = array<i64: 1, 128>}, {transform_indices = @transform_3, window_bounds = array<i64: 8, 128>}]} {
    %c0 = arith.constant 0 : index
    %c0_0 = arith.constant 0 : index
    %0 = vector.load %arg2[%c0, %c0_0] : memref<8x256xf32, #tpu.memory_space<vmem>>, vector<8x256xf32>
    %c0_1 = arith.constant 0 : index
    %c0_2 = arith.constant 0 : index
    %1 = vector.load %arg3[%c0_1, %c0_2] : memref<256x128xf32, #tpu.memory_space<vmem>>, vector<256x128xf32>
    %cst = arith.constant dense<0.000000e+00> : vector<8x128xf32>
    %2 = tpu.matmul %0, %1, %cst {dimension_numbers = #tpu.dot_dimension_numbers<[1], [0], [0], [1], [0, 0, 1, 1], [], []>} : vector<8x256xf32>, vector<256x128xf32>, vector<8x128xf32> -> vector<8x128xf32>
    %c0_i32 = arith.constant 0 : i32
    %3 = arith.cmpi eq, %arg1, %c0_i32 : i32
    %4 = arith.extui %3 : i1 to i32
    %c0_i32_3 = arith.constant 0 : i32
    %5 = arith.cmpi ne, %4, %c0_i32_3 : i32
    scf.if %5 {
      %c0_8 = arith.constant 0 : index
      %c0_9 = arith.constant 0 : index
      %12 = vector.load %arg4[%c0_8, %c0_9] : memref<1x128xf32, #tpu.memory_space<vmem>>, vector<1x128xf32>
      %13 = vector.broadcast %12 : vector<1x128xf32> to vector<8x128xf32>
      %14 = arith.addf %2, %13 : vector<8x128xf32>
      %c0_10 = arith.constant 0 : index
      %c0_11 = arith.constant 0 : index
      %15 = vector.load %arg5[%c0_10, %c0_11] : memref<8x128xf32, #tpu.memory_space<vmem>>, vector<8x128xf32>
      tpu.vector_store %arg5[%c0_10, %c0_11], %14 {strides = array<i32>} : memref<8x128xf32, #tpu.memory_space<vmem>>, vector<8x128xf32>,
    } else {
    }
    %c0_i32_4 = arith.constant 0 : i32
    %6 = arith.cmpi sgt, %arg1, %c0_i32_4 : i32
    %7 = arith.extui %6 : i1 to i32
    %c0_i32_5 = arith.constant 0 : i32
    %8 = arith.cmpi ne, %7, %c0_i32_5 : i32
    scf.if %8 {
      %c0_8 = arith.constant 0 : index
      %c0_9 = arith.constant 0 : index
      %12 = vector.load %arg5[%c0_8, %c0_9] : memref<8x128xf32, #tpu.memory_space<vmem>>, vector<8x128xf32>
      %13 = arith.addf %12, %2 : vector<8x128xf32>
      %c0_10 = arith.constant 0 : index
      %c0_11 = arith.constant 0 : index
      %14 = vector.load %arg5[%c0_10, %c0_11] : memref<8x128xf32, #tpu.memory_space<vmem>>, vector<8x128xf32>
      tpu.vector_store %arg5[%c0_10, %c0_11], %13 {strides = array<i32>} : memref<8x128xf32, #tpu.memory_space<vmem>>, vector<8x128xf32>,
    } else {
    }
    %c0_i32_6 = arith.constant 0 : i32
    %9 = arith.cmpi eq, %arg1, %c0_i32_6 : i32
    %10 = arith.extui %9 : i1 to i32
    %c0_i32_7 = arith.constant 0 : i32
    %11 = arith.cmpi ne, %10, %c0_i32_7 : i32
    scf.if %11 {
      %c0_8 = arith.constant 0 : index
      %c0_9 = arith.constant 0 : index
      %12 = vector.load %arg5[%c0_8, %c0_9] : memref<8x128xf32, #tpu.memory_space<vmem>>, vector<8x128xf32>
      %cst_10 = arith.constant 0.000000e+00 : f32
      %13 = vector.broadcast %cst_10 : f32 to vector<8x128xf32>
      %14 = arith.maximumf %12, %13 : vector<8x128xf32>
      %c0_11 = arith.constant 0 : index
      %c0_12 = arith.constant 0 : index
      %15 = vector.load %arg5[%c0_11, %c0_12] : memref<8x128xf32, #tpu.memory_space<vmem>>, vector<8x128xf32>
      tpu.vector_store %arg5[%c0_11, %c0_12], %14 {strides = array<i32>} : memref<8x128xf32, #tpu.memory_space<vmem>>, vector<8x128xf32>,
    } else {
    }
    return
  }
  func.func @transform_0(%arg0: i32, %arg1: i32) -> (i32, i32) {
    %c0_i32 = arith.constant 0 : i32
    return %arg0, %arg1 : i32, i32
  }
  func.func @transform_1(%arg0: i32, %arg1: i32) -> (i32, i32) {
    %c0_i32 = arith.constant 0 : i32
    %c0_i32_0 = arith.constant 0 : i32
    return %arg1, %c0_i32 : i32, i32
  }
  func.func @transform_2(%arg0: i32, %arg1: i32) -> (i32, i32) {
    %c0_i32 = arith.constant 0 : i32
    %c0_i32_0 = arith.constant 0 : i32
    %c0_i32_1 = arith.constant 0 : i32
    return %c0_i32, %c0_i32_0 : i32, i32
  }
  func.func @transform_3(%arg0: i32, %arg1: i32) -> (i32, i32) {
    %c0_i32 = arith.constant 0 : i32
    %c0_i32_0 = arith.constant 0 : i32
    return %arg0, %c0_i32 : i32, i32
  }
}

</mosaic_0001>

<llo_original>
// kernel: mrna_net_forward.1
$region0: #{mrna_net_forward.1}
  #allocation0 [shape = 'u32[]', space=smem, size = 0x4, offset = 0x4, fixed_abs, tag = 'smem constant byte address 0x4 - core index']
  #allocation1 [shape = 'u32[72,128]{1,0:T(1,128)}', space=vmem, size = 0x9000, scoped, tag = 'internal scratch']
  %s0 = inlined_call_operand.hbm [shape: f32[8,256], index: 0, kind: input, shape index: {}]
  %s1 = inlined_call_operand.hbm [shape: f32[256,128], index: 1, kind: input, shape index: {}]
  %s2 = inlined_call_operand.vmem [shape: f32[1,128], index: 2, kind: input, shape index: {}]
  %s3 = inlined_call_operand.hbm [shape: f32[8,128], index: 3, kind: output, shape index: {}]
  %s4 = sld [smem:[#allocation0]]
  $region42: #{mrna_net_forward.1} parent=0
    _
  %s6 = ssub.s32 1, %s4
  %s7 = scalar_select 0, %s6, %s4
  $region1: #{mrna_net_forward.1} parent=0
    #allocation2 [shape = 'u8[8192]{0}', space=vmem, size = 0x2000, scoped, tag = 'input window, operand 0, single buffered']
    #allocation3 [shape = 's32[1]{0}', space=sflag, size = 0x4, scoped, tag = 'scoped memory for mrna_net_forward.1']
    #allocation4 [shape = 's32[1]{0}', space=sflag, size = 0x4, scoped, tag = 'scoped memory for mrna_net_forward.1']
    #allocation5 [shape = 'u8[131072]{0}', space=vmem, size = 0x20000, scoped, tag = 'input window, operand 1, single buffered']
    #allocation6 [shape = 's32[1]{0}', space=sflag, size = 0x4, scoped, tag = 'scoped memory for mrna_net_forward.1']
    #allocation7 [shape = 'u8[4096]{0}', space=vmem, size = 0x1000, scoped, tag = 'output window, operand 0, single buffered']
    %8 = vsyncpa [#allocation3], 0
    %9 = vsyncpa [#allocation6], 0
    %10 = vsyncpa [#allocation4], 0
    // Predicated region
    $region2: #{mrna_net_forward.1} parent=1 // pred_check
      _
    $region3: #{mrna_net_forward.1} parent=1 // pred_check_branch
      %12 = sbr.rel (0) target = $region5
    $region4: #{mrna_net_forward.1} parent=1 // pred_region
      %14 = vsyncadd [#allocation3], 0
      %s16 = sshll.u32 %s0, 4
      %s17 = int_to_ptr.hbm [resolvable:$true] %s16
      %s18 = sshll.u32 [#allocation2], 4
      %s19 = int_to_ptr.vmem [resolvable:$true] %s18
      %21 = dma.hbm_to_vmem [thread:$0]  %s17, 256, %s19, [#allocation3]
    $region5: #{mrna_net_forward.1} parent=1 // pred_fallthru
      _
    // Predicated region
    $region6: #{mrna_net_forward.1} parent=1 // pred_check
      _
    $region7: #{mrna_net_forward.1} parent=1 // pred_check_branch
      %23 = sbr.rel (0) target = $region9
    $region8: #{mrna_net_forward.1} parent=1 // pred_region
      %25 = vsyncadd [#allocation6], 0
      %s26 = sshll.u32 %s1, 4
      %s27 = int_to_ptr.hbm [resolvable:$true] %s26
      %s28 = sshll.u32 [#allocation5], 4
      %s29 = int_to_ptr.vmem [resolvable:$true] %s28
      %34 = dma.hbm_to_vmem [thread:$0]  %s27, 4096, %s29, [#allocation6], 128, 128, 8
    $region9: #{mrna_net_forward.1} parent=1 // pred_fallthru
      _
    // Predicated region
    $region10: #{mrna_net_forward.1} parent=1 // pred_check
      _
    $region11: #{mrna_net_forward.1} parent=1 // pred_check_branch
      %36 = sbr.rel (0) target = $region13
    $region12: #{mrna_net_forward.1} parent=1 // pred_region
      _
    $region13: #{mrna_net_forward.1} parent=1 // pred_fallthru
      _
    // Predicated region
    $region14: #{mrna_net_forward.1} parent=1 // pred_check
      _
    $region15: #{mrna_net_forward.1} parent=1 // pred_check_branch
      %38 = sbr.rel (0) target = $region17
    $region16: #{mrna_net_forward.1} parent=1 // pred_region
      %40 = dma.done [#allocation3], 256
    $region17: #{mrna_net_forward.1} parent=1 // pred_fallthru
      _
    // Predicated region
    $region18: #{mrna_net_forward.1} parent=1 // pred_check
      _
    $region19: #{mrna_net_forward.1} parent=1 // pred_check_branch
      %42 = sbr.rel (0) target = $region21
    $region20: #{mrna_net_forward.1} parent=1 // pred_region
      %44 = dma.done [#allocation6], 4096
    $region21: #{mrna_net_forward.1} parent=1 // pred_fallthru
      _
    %v45 = vld [vmem:[#allocation2] sm:$0xff]
    %v46 = vld [vmem:[#allocation2 + $0x8] sm:$0xff]
    %v47 = vld [vmem:[#allocation5] sm:$0xff]
    %v48 = vld [vmem:[#allocation5 + $0x8] sm:$0xff]
    %v49 = vld [vmem:[#allocation5 + $0x10] sm:$0xff]
    %v50 = vld [vmem:[#allocation5 + $0x18] sm:$0xff]
    %v51 = vld [vmem:[#allocation5 + $0x20] sm:$0xff]
    %v52 = vld [vmem:[#allocation5 + $0x28] sm:$0xff]
    %v53 = vld [vmem:[#allocation5 + $0x30] sm:$0xff]
    %v54 = vld [vmem:[#allocation5 + $0x38] sm:$0xff]
    %v55 = vld [vmem:[#allocation5 + $0x40] sm:$0xff]
    %v56 = vld [vmem:[#allocation5 + $0x48] sm:$0xff]
    %v57 = vld [vmem:[#allocation5 + $0x50] sm:$0xff]
    %v58 = vld [vmem:[#allocation5 + $0x58] sm:$0xff]
    %v59 = vld [vmem:[#allocation5 + $0x60] sm:$0xff]
    %v60 = vld [vmem:[#allocation5 + $0x68] sm:$0xff]
    %v61 = vld [vmem:[#allocation5 + $0x70] sm:$0xff]
    %v62 = vld [vmem:[#allocation5 + $0x78] sm:$0xff]
    %v63 = vld [vmem:[#allocation5 + $0x80] sm:$0xff]
    %v64 = vld [vmem:[#allocation5 + $0x88] sm:$0xff]
    %v65 = vld [vmem:[#allocation5 + $0x90] sm:$0xff]
    %v66 = vld [vmem:[#allocation5 + $0x98] sm:$0xff]
    %v67 = vld [vmem:[#allocation5 + $0xa0] sm:$0xff]
    %v68 = vld [vmem:[#allocation5 + $0xa8] sm:$0xff]
    %v69 = vld [vmem:[#allocation5 + $0xb0] sm:$0xff]
    %v70 = vld [vmem:[#allocation5 + $0xb8] sm:$0xff]
    %v71 = vld [vmem:[#allocation5 + $0xc0] sm:$0xff]
    %v72 = vld [vmem:[#allocation5 + $0xc8] sm:$0xff]
    %v73 = vld [vmem:[#allocation5 + $0xd0] sm:$0xff]
    %v74 = vld [vmem:[#allocation5 + $0xd8] sm:$0xff]
    %v75 = vld [vmem:[#allocation5 + $0xe0] sm:$0xff]
    %v76 = vld [vmem:[#allocation5 + $0xe8] sm:$0xff]
    %v77 = vld [vmem:[#allocation5 + $0xf0] sm:$0xff]
    %v78 = vld [vmem:[#allocation5 + $0xf8] sm:$0xff]
    %79 = vmatpush.msra.mxu0 %v62
    %80 = vmatpush.msra.mxu0 %v61
    %81 = vmatpush.msra.mxu0 %v60
    %82 = vmatpush.msra.mxu0 %v59
    %83 = vmatpush.msra.mxu0 %v58
    %84 = vmatpush.msra.mxu0 %v57
    %85 = vmatpush.msra.mxu0 %v56
    %86 = vmatpush.msra.mxu0 %v55
    %87 = vmatpush.msra.mxu0 %v54
    %88 = vmatpush.msra.mxu0 %v53
    %89 = vmatpush.msra.mxu0 %v52
    %90 = vmatpush.msra.mxu0 %v51
    %91 = vmatpush.msra.mxu0 %v50
    %92 = vmatpush.msra.mxu0 %v49
    %93 = vmatpush.msra.mxu0 %v48
    %94 = vmatpush.msra.mxu0 %v47
    %95 = vmatmul.f32.gmra.mxu0 %v45
    %v96 = vpop.f32.mrf.mxu0
    %v97 = vadd.f32 0.0, %v96
    %98 = vdwg.mxu0
    %99 = vmatpush.msra.mxu0 %v78
    %100 = vmatpush.msra.mxu0 %v77
    %101 = vmatpush.msra.mxu0 %v76
    %102 = vmatpush.msra.mxu0 %v75
    %103 = vmatpush.msra.mxu0 %v74
    %104 = vmatpush.msra.mxu0 %v73
    %105 = vmatpush.msra.mxu0 %v72
    %106 = vmatpush.msra.mxu0 %v71
    %107 = vmatpush.msra.mxu0 %v70
    %108 = vmatpush.msra.mxu0 %v69
    %109 = vmatpush.msra.mxu0 %v68
    %110 = vmatpush.msra.mxu0 %v67
    %111 = vmatpush.msra.mxu0 %v66
    %112 = vmatpush.msra.mxu0 %v65
    %113 = vmatpush.msra.mxu0 %v64
    %114 = vmatpush.msra.mxu0 %v63
    %115 = vmatmul.f32.gmra.mxu0 %v46
    %v116 = vpop.f32.mrf.mxu0
    %v117 = vadd.f32 %v97, %v116
    %118 = vdwg.mxu0
    %p119 = scmp.eq.s32.totalorder 0, 0
    // Predicated region
    $region22: #{mrna_net_forward.1} parent=1 // pred_check
      %p120 = pneg %p119
    $region23: #{mrna_net_forward.1} parent=1 // pred_check_branch
      %122 = sbr.rel (%p120) target = $region25
    $region24: #{mrna_net_forward.1} parent=1 // pred_region
      %v123 = vld [vmem:[%s2] sm:$0x1]
      %v125 = vperm.slane %v123, 0
      %v127 = vadd.f32 %v117, %v125
      %128 = vst [vmem:[#allocation7] sm:$0xff] %v127
    $region25: #{mrna_net_forward.1} parent=1 // pred_fallthru
      _
    %p129 = scmp.gt.s32.totalorder 0, 0
    // Predicated region
    $region26: #{mrna_net_forward.1} parent=1 // pred_check
      %p130 = pneg %p129
    $region27: #{mrna_net_forward.1} parent=1 // pred_check_branch
      %132 = sbr.rel (%p130) target = $region29
    $region28: #{mrna_net_forward.1} parent=1 // pred_region
      %v133 = vld [vmem:[#allocation7] sm:$0xff]
      %v134 = vadd.f32 %v133, %v117
      %135 = vst [vmem:[#allocation7] sm:$0xff] %v134
    $region29: #{mrna_net_forward.1} parent=1 // pred_fallthru
      _
    // Predicated region
    $region30: #{mrna_net_forward.1} parent=1 // pred_check
      %p136 = pneg %p119
    $region31: #{mrna_net_forward.1} parent=1 // pred_check_branch
      %138 = sbr.rel (%p136) target = $region33
    $region32: #{mrna_net_forward.1} parent=1 // pred_region
      %v139 = vld [vmem:[#allocation7] sm:$0xff]
      %v140 = vmax.f32 %v139, 0.0
      %141 = vst [vmem:[#allocation7] sm:$0xff] %v140
    $region33: #{mrna_net_forward.1} parent=1 // pred_fallthru
      _
    // Predicated region
    $region34: #{mrna_net_forward.1} parent=1 // pred_check
      _
    $region35: #{mrna_net_forward.1} parent=1 // pred_check_branch
      %143 = sbr.rel (0) target = $region37
    $region36: #{mrna_net_forward.1} parent=1 // pred_region
      %145 = vsyncadd [#allocation4], 0
      %s147 = sshll.u32 [#allocation7], 4
      %s148 = int_to_ptr.vmem [resolvable:$true] %s147
      %s149 = sshll.u32 %s3, 4
      %s150 = int_to_ptr.hbm [resolvable:$true] %s149
      %152 = dma.vmem_to_hbm [thread:$0]  %s148, 128, %s150, [#allocation4]
    $region37: #{mrna_net_forward.1} parent=1 // pred_fallthru
      _
    // Predicated region
    $region38: #{mrna_net_forward.1} parent=1 // pred_check
      _
    $region39: #{mrna_net_forward.1} parent=1 // pred_check_branch
      %154 = sbr.rel (0) target = $region41
    $region40: #{mrna_net_forward.1} parent=1 // pred_region
      %156 = dma.done [#allocation4], 128
    $region41: #{mrna_net_forward.1} parent=1 // pred_fallthru
      _
    %157 = vsyncpa [#allocation3], 1
    %158 = vsyncpa [#allocation6], 1
    %159 = vsyncpa [#allocation4], 1

</llo_original>
